<compile_context>
chip_gen: v7x
topology: tpu7x:2x2x1
jax: 0.10.0
libtpu: 0.0.40
codegen_flags: <defaults>
</compile_context>

<pallas_src>
import functools

import jax
import jax.numpy as jnp
from jax.experimental import pallas as pl
from jax.experimental.pallas import tpu as pltpu


# ----------------------------------------------------------------------------
# Per-chip policy
# ----------------------------------------------------------------------------
@functools.lru_cache(maxsize=1)
def _tpu_policy():
    """VMEM limit / fused budget / TC-count / bf16-VPU policy for this chip."""
    vmem_cap = None
    try:
        info = pltpu.get_tpu_info()
        vmem_cap = int(getattr(info, "vmem_capacity_bytes"))
    except Exception:
        vmem_cap = None

    kind = ""
    try:
        kind = jax.devices()[0].device_kind.lower()
    except Exception:
        pass

    is_v7 = "v7" in kind
    if vmem_cap is None or vmem_cap <= 0:
        if is_v7:
            vmem_cap = 64 * 1024 * 1024
        elif any(v in kind for v in ("v4", "v5", "v6")):
            vmem_cap = 128 * 1024 * 1024
        else:
            vmem_cap = 64 * 1024 * 1024  # unknown part: stay conservative

    vmem_limit = int(0.75 * vmem_cap)      # leave headroom for compiler scratch
    fused_budget = vmem_limit // 2         # fused per-step working-set budget
    num_tc = 2 if is_v7 else 1
    min_fused_steps = 2 * num_tc if num_tc > 1 else 1
    bf16_vpu = not any(v in kind for v in ("v4", "v5"))   # v6e/v7x have bf16 VPU
    return {
        "vmem_limit": vmem_limit,
        "fused_budget": fused_budget,
        "min_fused_steps": min_fused_steps,
        "bf16_vpu": bf16_vpu,
    }


def _round_down(v, m):
    return (v // m) * m


# ----------------------------------------------------------------------------
# Kernels
# ----------------------------------------------------------------------------
def _make_fused_kernel(inv_hw, native_mul):
    def kernel(x_ref, w1t_ref, b1_ref, w2_ref, b2_ref, o_ref):
        # x_ref/o_ref: (C, HW); w1t: (C, Cmid); b1: (1, Cmid); w2: (C, Cmid); b2: (C, 1)
        xf = x_ref[...].astype(jnp.float32)
        pooled = jnp.sum(xf, axis=1, keepdims=True) * inv_hw                        # (C, 1)
        # FC1 / FC2 on the VPU (broadcast-mul + small reduce).
        z1 = jnp.sum(w1t_ref[...] * pooled, axis=0, keepdims=True) + b1_ref[...]    # (1, Cmid)
        z1 = jnp.maximum(z1, 0.0)
        z2 = jnp.sum(w2_ref[...] * z1, axis=1, keepdims=True) + b2_ref[...]         # (C, 1)
        scale = jax.nn.sigmoid(z2)                                                  # (C, 1)
        # Re-read x from VMEM for the rescale (keeps the (C, HW) tile out of vregs
        # across the pooling reduction).
        if native_mul:
            # bf16-native multiply (v6e/v7x): half the vreg/store pressure.
            o_ref[...] = x_ref[...] * scale.astype(o_ref.dtype)
        else:
            o_ref[...] = (x_ref[...].astype(jnp.float32) * scale).astype(o_ref.dtype)

    return kernel


def _make_pool_fc_kernel(inv_hw, hw_total, hw_tile, ragged):
    def kernel(x_ref, w1t_ref, b1_ref, w2_ref, b2_ref, s_ref):
        # x_ref: (C, hw_tile); s_ref: (C, 1) f32 output block, resident across h.
        h = pl.program_id(1)
        xf = x_ref[...].astype(jnp.float32)
        if ragged:
            # Mask garbage lanes of the overhanging last tile (cdiv grid, no pad).
            col = jax.lax.broadcasted_iota(jnp.int32, xf.shape, 1) + h * hw_tile
            xf = jnp.where(col < hw_total, xf, 0.0)
        partial = jnp.sum(xf, axis=1, keepdims=True)

        @pl.when(h == 0)
        def _():
            s_ref[...] = partial

        @pl.when(h > 0)
        def _():
            s_ref[...] = s_ref[...] + partial

        @pl.when(h == pl.num_programs(1) - 1)
        def _():
            pooled = s_ref[...] * inv_hw                                          # (C, 1)
            z1 = jnp.sum(w1t_ref[...] * pooled, axis=0, keepdims=True) + b1_ref[...]
            z1 = jnp.maximum(z1, 0.0)
            z2 = jnp.sum(w2_ref[...] * z1, axis=1, keepdims=True) + b2_ref[...]
            s_ref[...] = jax.nn.sigmoid(z2)

    return kernel


def _make_scale_kernel(native_mul):
    def kernel(x_ref, s_ref, o_ref):
        # x_ref/o_ref: (row_tile, hw_tile); s_ref: (row_tile, 1) f32.
        if native_mul:
            o_ref[...] = x_ref[...] * s_ref[...].astype(o_ref.dtype)
        else:
            o_ref[...] = (x_ref[...].astype(jnp.float32) * s_ref[...]).astype(o_ref.dtype)

    return kernel


# ----------------------------------------------------------------------------
# pallas_call wrappers
# ----------------------------------------------------------------------------
def _ca_fused(x3, w1t, b1r, w2f, b2c, *, inv_hw, native_mul, vmem_limit):
    N, C, HW = x3.shape
    Cmid = w1t.shape[1]
    return pl.pallas_call(
        _make_fused_kernel(inv_hw, native_mul),
        out_shape=jax.ShapeDtypeStruct((N, C, HW), x3.dtype),
        grid_spec=pltpu.PrefetchScalarGridSpec(
            num_scalar_prefetch=0,
            grid=(N,),
            in_specs=[
                pl.BlockSpec((pl.Squeezed(), C, HW), lambda n: (n, 0, 0)),
                pl.BlockSpec((C, Cmid), lambda n: (0, 0)),
                pl.BlockSpec((1, Cmid), lambda n: (0, 0)),
                pl.BlockSpec((C, Cmid), lambda n: (0, 0)),
                pl.BlockSpec((C, 1), lambda n: (0, 0)),
            ],
            out_specs=pl.BlockSpec((pl.Squeezed(), C, HW), lambda n: (n, 0, 0)),
        ),
        compiler_params=pltpu.CompilerParams(
            dimension_semantics=("parallel",),
            vmem_limit_bytes=vmem_limit,
        ),
    )(x3, w1t, b1r, w2f, b2c)


def _ca_pool_fc(x3, w1t, b1r, w2f, b2c, *, inv_hw, hw_tile, vmem_limit):
    N, C, HW = x3.shape
    Cmid = w1t.shape[1]
    n_hw = pl.cdiv(HW, hw_tile)
    ragged = (HW % hw_tile) != 0
    return pl.pallas_call(
        _make_pool_fc_kernel(inv_hw, HW, hw_tile, ragged),
        out_shape=jax.ShapeDtypeStruct((N, C, 1), jnp.float32),
        grid_spec=pltpu.PrefetchScalarGridSpec(
            num_scalar_prefetch=0,
            grid=(N, n_hw),
            in_specs=[
                pl.BlockSpec((pl.Squeezed(), C, hw_tile), lambda n, h: (n, 0, h)),
                pl.BlockSpec((C, Cmid), lambda n, h: (0, 0)),
                pl.BlockSpec((1, Cmid), lambda n, h: (0, 0)),
                pl.BlockSpec((C, Cmid), lambda n, h: (0, 0)),
                pl.BlockSpec((C, 1), lambda n, h: (0, 0)),
            ],
            out_specs=pl.BlockSpec((pl.Squeezed(), C, 1), lambda n, h: (n, 0, 0)),
        ),
        compiler_params=pltpu.CompilerParams(
            dimension_semantics=("parallel", "arbitrary"),
            vmem_limit_bytes=vmem_limit,
        ),
    )(x3, w1t, b1r, w2f, b2c)


def _ca_apply_scale(x2, s2, *, row_tile, hw_tile, native_mul, vmem_limit):
    R, HW = x2.shape
    return pl.pallas_call(
        _make_scale_kernel(native_mul),
        out_shape=jax.ShapeDtypeStruct((R, HW), x2.dtype),
        grid_spec=pltpu.PrefetchScalarGridSpec(
            num_scalar_prefetch=0,
            grid=(pl.cdiv(R, row_tile), pl.cdiv(HW, hw_tile)),
            in_specs=[
                pl.BlockSpec((row_tile, hw_tile), lambda r, h: (r, h)),
                pl.BlockSpec((row_tile, 1), lambda r, h: (r, 0)),
            ],
            out_specs=pl.BlockSpec((row_tile, hw_tile), lambda r, h: (r, h)),
        ),
        compiler_params=pltpu.CompilerParams(
            dimension_semantics=("parallel", "parallel"),
            vmem_limit_bytes=vmem_limit,
        ),
    )(x2, s2)


# ----------------------------------------------------------------------------
# Public entry point
# ----------------------------------------------------------------------------
def ca_layer(x, w1, b1, w2, b2, *, fused_vmem_budget_bytes=None):
    """CALayer forward: x * sigmoid(W2 @ relu(W1 @ avgpool(x) + b1) + b2).

    x: (N, C, H, W);  w1: (Cmid, C);  b1: (Cmid,);  w2: (C, Cmid);  b2: (C,).
    Output dtype == x.dtype; internal math in f32 (bf16 rounding only at output).
    `fused_vmem_budget_bytes=None` -> 50% of the per-chip VMEM limit (96 MiB on
    v5e/v6e, 48 MiB on v7x); pass 0 to force the two-pass path.
    """
    policy = _tpu_policy()
    vmem_limit = policy["vmem_limit"]
    if fused_vmem_budget_bytes is None:
        fused_vmem_budget_bytes = policy["fused_budget"]

    N, C, H, W = x.shape
    Cmid = w1.shape[0]
    HW = H * W
    inv_hw = 1.0 / float(HW)
    itemsize = jnp.dtype(x.dtype).itemsize
    native_mul = policy["bf16_vpu"] and itemsize == 2

    # Parameters are tiny; keep them in f32 in a VPU-friendly layout.
    w1t = jnp.asarray(w1, jnp.float32).T.reshape(C, Cmid)   # W1^T
    w2f = jnp.asarray(w2, jnp.float32).reshape(C, Cmid)
    b1r = jnp.asarray(b1, jnp.float32).reshape(1, Cmid)
    b2c = jnp.asarray(b2, jnp.float32).reshape(C, 1)

    x3 = x.reshape(N, C, HW)

    # -------- fused-path working-set estimate (includes f32 block temporaries) --
    io_block = C * HW * itemsize
    n_f32_temps = 1 if itemsize == 4 else (1 if native_mul else 2)
    f32_temps = n_f32_temps * C * HW * 4
    weight_bytes = (2 * C * Cmid + C + Cmid) * 4
    fused_bytes = 4 * io_block + f32_temps + weight_bytes + 256 * 1024
    if fused_bytes <= fused_vmem_budget_bytes and N >= policy["min_fused_steps"]:
        out3 = _ca_fused(x3, w1t, b1r, w2f, b2c,
                         inv_hw=inv_hw, native_mul=native_mul, vmem_limit=vmem_limit)
        return out3.reshape(N, C, H, W)

    # -------- two-pass path (large C*HW or too few fused grid steps) --------
    # No wrapper-side padding/slicing (that would add 2 extra full passes over
    # the tensor); cdiv grids with a masked overhanging last tile instead.
    target_bytes = 4 * 1024 * 1024  # ~4 MiB x-blocks sit at ~86% of HBM roofline

    # Pass 1: (N, C, 1) channel-attention scale, tiled over HW.
    hw_tile1 = max(128, _round_down(target_bytes // max(1, C * itemsize), 128))
    if hw_tile1 >= HW:
        hw_tile1 = HW  # full extent: always layout-legal, no masking needed
    s = _ca_pool_fc(x3, w1t, b1r, w2f, b2c,
                    inv_hw=inv_hw, hw_tile=hw_tile1, vmem_limit=vmem_limit)

    # Pass 2: elementwise rescale over (N*C, HW) with byte-targeted tiles and a
    # fully parallel 2-D grid (plenty of granularity for v7x's two TensorCores).
    rows = N * C
    row_tile = rows if rows <= 256 else 256          # 256 is 8- and 16-aligned
    hw_tile2 = max(128, _round_down(target_bytes // max(1, row_tile * itemsize), 128))
    if hw_tile2 >= HW:
        hw_tile2 = HW
    x2 = x3.reshape(rows, HW)
    s2 = s.reshape(rows, 1)
    out2 = _ca_apply_scale(x2, s2, row_tile=row_tile, hw_tile=hw_tile2,
                           native_mul=native_mul, vmem_limit=vmem_limit)
    return out2.reshape(N, C, H, W)


# ----------------------------------------------------------------------------
# Pure-JAX reference
# ----------------------------------------------------------------------------
def ca_layer_ref(x, w1, b1, w2, b2):
    xf = x.astype(jnp.float32)
    y = jnp.mean(xf, axis=(2, 3))                                             # (N, C)
    z1 = jnp.maximum(
        jnp.dot(y, w1.T, precision=jax.lax.Precision.HIGHEST) + b1, 0.0)      # (N, Cmid)
    s = jax.nn.sigmoid(
        jnp.dot(z1, w2.T, precision=jax.lax.Precision.HIGHEST) + b2)          # (N, C)
    return xf * s[:, :, None, None]


if __name__ == "__main__":
    # Small, CALayer-consistent demo shapes: channel=32, reduction=4 -> mid=8.
    N, C, H, W = 2, 32, 16, 16
    reduction = 4
    Cmid = C // reduction

    key = jax.random.PRNGKey(0)
    kx, k1, k2, k3, k4 = jax.random.split(key, 5)
    x = jax.random.normal(kx, (N, C, H, W), dtype=jnp.float32)
    w1 = 0.1 * jax.random.normal(k1, (Cmid, C), dtype=jnp.float32)
    b1 = 0.1 * jax.random.normal(k2, (Cmid,), dtype=jnp.float32)
    w2 = 0.1 * jax.random.normal(k3, (C, Cmid), dtype=jnp.float32)
    b2 = 0.1 * jax.random.normal(k4, (C,), dtype=jnp.float32)

    ref = ca_layer_ref(x, w1, b1, w2, b2)

    # 1) Default path (fused if the chip policy allows it at this shape).
    out_def = jax.block_until_ready(ca_layer(x, w1, b1, w2, b2))
    assert out_def.shape == (N, C, H, W)
    assert jnp.allclose(out_def, ref, atol=1e-5, rtol=1e-5), "default path mismatch"

    # 2) Two-pass path (forced), exercising tiled pooling + lane-dense rescale.
    out_2p = jax.block_until_ready(
        ca_layer(x, w1, b1, w2, b2, fused_vmem_budget_bytes=0))
    assert jnp.allclose(out_2p, ref, atol=1e-5, rtol=1e-5), "two-pass mismatch"

    # 3) Two-pass with HW not a multiple of 128 (ragged tiles, no padding).
    Ho, Wo = 10, 10
    xo = jax.random.normal(jax.random.PRNGKey(1), (N, C, Ho, Wo), dtype=jnp.float32)
    ref_o = ca_layer_ref(xo, w1, b1, w2, b2)
    out_o = jax.block_until_ready(
        ca_layer(xo, w1, b1, w2, b2, fused_vmem_budget_bytes=0))
    assert jnp.allclose(out_o, ref_o, atol=1e-5, rtol=1e-5), "ragged two-pass mismatch"

    # 4) bf16 I/O path (params stay f32; pooling/FC in f32; bf16 rescale where allowed).
    xb = x.astype(jnp.bfloat16)
    ref_b = ca_layer_ref(xb, w1, b1, w2, b2)
    out_b = jax.block_until_ready(ca_layer(xb, w1, b1, w2, b2))
    assert out_b.dtype == jnp.bfloat16
    assert jnp.allclose(out_b.astype(jnp.float32), ref_b, atol=5e-2, rtol=5e-2), \
        "bf16 path mismatch"

    # 5) bf16 + forced two-pass + ragged HW together.
    xob = xo.astype(jnp.bfloat16)
    ref_ob = ca_layer_ref(xob, w1, b1, w2, b2)
    out_ob = jax.block_until_ready(
        ca_layer(xob, w1, b1, w2, b2, fused_vmem_budget_bytes=0))
    assert jnp.allclose(out_ob.astype(jnp.float32), ref_ob, atol=5e-2, rtol=5e-2), \
        "bf16 ragged two-pass mismatch"

    print("KERNEL_OK")
</pallas_src>

<mosaic_0001>
module attributes {stable_mosaic.version = 11 : i64} {
  func.func @kernel(%arg0: i32, %arg1: memref<1x32x256xf32, #tpu.memory_space<vmem>>, %arg2: memref<32x8xf32, #tpu.memory_space<vmem>>, %arg3: memref<1x8xf32, #tpu.memory_space<vmem>>, %arg4: memref<32x8xf32, #tpu.memory_space<vmem>>, %arg5: memref<32x1xf32, #tpu.memory_space<vmem>>, %arg6: memref<1x32x256xf32, #tpu.memory_space<vmem>>) attributes {dimension_semantics = [#tpu.dimension_semantics<parallel>], iteration_bounds = array<i64: 2>, scalar_prefetch = 0 : i64, scratch_operands = 0 : i64, tpu.core_type = #tpu.core_type<tc>, window_params = [{transform_indices = @transform_0, window_bounds = array<i64: 1, 32, 256>}, {pipeline_mode = #tpu.pipeline_mode<synchronous>, transform_indices = @transform_1, window_bounds = array<i64: 32, 8>}, {pipeline_mode = #tpu.pipeline_mode<synchronous>, transform_indices = @transform_2, window_bounds = array<i64: 1, 8>}, {pipeline_mode = #tpu.pipeline_mode<synchronous>, transform_indices = @transform_3, window_bounds = array<i64: 32, 8>}, {pipeline_mode = #tpu.pipeline_mode<synchronous>, transform_indices = @transform_4, window_bounds = array<i64: 32, 1>}, {transform_indices = @transform_5, window_bounds = array<i64: 1, 32, 256>}]} {
    %c0 = arith.constant 0 : index
    %c0_0 = arith.constant 0 : index
    %c0_1 = arith.constant 0 : index
    %0 = vector.load %arg1[%c0, %c0_0, %c0_1] : memref<1x32x256xf32, #tpu.memory_space<vmem>>, vector<1x32x256xf32>
    %1 = vector.shape_cast %0 : vector<1x32x256xf32> to vector<32x256xf32>
    %cst = arith.constant dense<0.000000e+00> : vector<32xf32>
    %2 = vector.multi_reduction <add>, %1, %cst [1] : vector<32x256xf32> to vector<32xf32>
    %3 = vector.shape_cast %2 : vector<32xf32> to vector<32x1xf32>
    %cst_2 = arith.constant 3.906250e-03 : f32
    %4 = vector.broadcast %cst_2 : f32 to vector<32x1xf32>
    %5 = arith.mulf %3, %4 : vector<32x1xf32>
    %c0_3 = arith.constant 0 : index
    %c0_4 = arith.constant 0 : index
    %6 = vector.load %arg2[%c0_3, %c0_4] : memref<32x8xf32, #tpu.memory_space<vmem>>, vector<32x8xf32>
    %7 = vector.broadcast %5 : vector<32x1xf32> to vector<32x8xf32>
    %8 = arith.mulf %6, %7 : vector<32x8xf32>
    %cst_5 = arith.constant dense<0.000000e+00> : vector<8xf32>
    %9 = vector.multi_reduction <add>, %8, %cst_5 [0] : vector<32x8xf32> to vector<8xf32>
    %10 = vector.shape_cast %9 : vector<8xf32> to vector<1x8xf32>
    %c0_6 = arith.constant 0 : index
    %c0_7 = arith.constant 0 : index
    %11 = vector.load %arg3[%c0_6, %c0_7] : memref<1x8xf32, #tpu.memory_space<vmem>>, vector<1x8xf32>
    %12 = arith.addf %10, %11 : vector<1x8xf32>
    %cst_8 = arith.constant 0.000000e+00 : f32
    %13 = vector.broadcast %cst_8 : f32 to vector<1x8xf32>
    %14 = arith.maximumf %12, %13 : vector<1x8xf32>
    %c0_9 = arith.constant 0 : index
    %c0_10 = arith.constant 0 : index
    %15 = vector.load %arg4[%c0_9, %c0_10] : memref<32x8xf32, #tpu.memory_space<vmem>>, vector<32x8xf32>
    %16 = vector.broadcast %14 : vector<1x8xf32> to vector<32x8xf32>
    %17 = arith.mulf %15, %16 : vector<32x8xf32>
    %cst_11 = arith.constant dense<0.000000e+00> : vector<32xf32>
    %18 = vector.multi_reduction <add>, %17, %cst_11 [1] : vector<32x8xf32> to vector<32xf32>
    %19 = vector.shape_cast %18 : vector<32xf32> to vector<32x1xf32>
    %c0_12 = arith.constant 0 : index
    %c0_13 = arith.constant 0 : index
    %20 = vector.load %arg5[%c0_12, %c0_13] : memref<32x1xf32, #tpu.memory_space<vmem>>, vector<32x1xf32>
    %21 = arith.addf %19, %20 : vector<32x1xf32>
    %22 = arith.negf %21 : vector<32x1xf32>
    %23 = math.exp %22 : vector<32x1xf32>
    %cst_14 = arith.constant 1.000000e+00 : f32
    %24 = vector.broadcast %cst_14 : f32 to vector<32x1xf32>
    %25 = arith.addf %24, %23 : vector<32x1xf32>
    %26 = arith.divf %24, %25 : vector<32x1xf32>
    %c0_15 = arith.constant 0 : index
    %c0_16 = arith.constant 0 : index
    %c0_17 = arith.constant 0 : index
    %27 = vector.load %arg1[%c0_15, %c0_16, %c0_17] : memref<1x32x256xf32, #tpu.memory_space<vmem>>, vector<1x32x256xf32>
    %28 = vector.shape_cast %27 : vector<1x32x256xf32> to vector<32x256xf32>
    %29 = vector.broadcast %26 : vector<32x1xf32> to vector<32x256xf32>
    %30 = arith.mulf %28, %29 : vector<32x256xf32>
    %c0_18 = arith.constant 0 : index
    %c0_19 = arith.constant 0 : index
    %c0_20 = arith.constant 0 : index
    %31 = vector.load %arg6[%c0_18, %c0_19, %c0_20] : memref<1x32x256xf32, #tpu.memory_space<vmem>>, vector<1x32x256xf32>
    %32 = vector.shape_cast %31 : vector<1x32x256xf32> to vector<32x256xf32>
    %33 = vector.shape_cast %30 : vector<32x256xf32> to vector<1x32x256xf32>
    tpu.vector_store %arg6[%c0_18, %c0_19, %c0_20], %33 {strides = array<i32>} : memref<1x32x256xf32, #tpu.memory_space<vmem>>, vector<1x32x256xf32>,
    return
  }
  func.func @transform_0(%arg0: i32) -> (i32, i32, i32) {
    %c0_i32 = arith.constant 0 : i32
    %c0_i32_0 = arith.constant 0 : i32
    %c0_i32_1 = arith.constant 0 : i32
    return %arg0, %c0_i32, %c0_i32_0 : i32, i32, i32
  }
  func.func @transform_1(%arg0: i32) -> (i32, i32) {
    %c0_i32 = arith.constant 0 : i32
    %c0_i32_0 = arith.constant 0 : i32
    %c0_i32_1 = arith.constant 0 : i32
    return %c0_i32, %c0_i32_0 : i32, i32
  }
  func.func @transform_2(%arg0: i32) -> (i32, i32) {
    %c0_i32 = arith.constant 0 : i32
    %c0_i32_0 = arith.constant 0 : i32
    %c0_i32_1 = arith.constant 0 : i32
    return %c0_i32, %c0_i32_0 : i32, i32
  }
  func.func @transform_3(%arg0: i32) -> (i32, i32) {
    %c0_i32 = arith.constant 0 : i32
    %c0_i32_0 = arith.constant 0 : i32
    %c0_i32_1 = arith.constant 0 : i32
    return %c0_i32, %c0_i32_0 : i32, i32
  }
  func.func @transform_4(%arg0: i32) -> (i32, i32) {
    %c0_i32 = arith.constant 0 : i32
    %c0_i32_0 = arith.constant 0 : i32
    %c0_i32_1 = arith.constant 0 : i32
    return %c0_i32, %c0_i32_0 : i32, i32
  }
  func.func @transform_5(%arg0: i32) -> (i32, i32, i32) {
    %c0_i32 = arith.constant 0 : i32
    %c0_i32_0 = arith.constant 0 : i32
    %c0_i32_1 = arith.constant 0 : i32
    return %arg0, %c0_i32, %c0_i32_0 : i32, i32, i32
  }
}

</mosaic_0001>

<llo_original>
// kernel: tpu_custom_call.1
$region0: #{tpu_custom_call.1}
  #allocation0 [shape = 'u32[]', space=smem, size = 0x4, offset = 0x4, fixed_abs, tag = 'smem constant byte address 0x4 - core index']
  #allocation1 [shape = 'u32[144,128]{1,0:T(1,128)}', space=vmem, size = 0x12000, scoped, tag = 'internal scratch']
  %s0 = inlined_call_operand.hbm [shape: f32[2,32,256], index: 0, kind: input, shape index: {}]
  %s1 = inlined_call_operand.vmem [shape: f32[32,8], index: 1, kind: input, shape index: {}]
  %s2 = inlined_call_operand.vmem [shape: f32[1,8], index: 2, kind: input, shape index: {}]
  %s3 = inlined_call_operand.vmem [shape: f32[32,8], index: 3, kind: input, shape index: {}]
  %s4 = inlined_call_operand.vmem [shape: f32[32,1], index: 4, kind: input, shape index: {}]
  %s5 = inlined_call_operand.hbm [shape: f32[2,32,256], index: 5, kind: output, shape index: {}]
  %s6 = sld [smem:[#allocation0]]
  $region57: #{tpu_custom_call.1} parent=0
    _
  %s8 = ssub.s32 1, %s6
  %s9 = scalar_select 0, %s8, %s6
  $region1: #{tpu_custom_call.1} parent=0
    #allocation2 [shape = 'u8[65536]{0}', space=vmem, size = 0x10000, scoped, tag = 'input window, operand 0']
    #allocation3 [shape = 's32[2]{0}', space=sflag, size = 0x8, scoped, tag = 'scoped memory for tpu_custom_call.1']
    #allocation4 [shape = 's32[2]{0}', space=sflag, size = 0x8, scoped, tag = 'scoped memory for tpu_custom_call.1']
    #allocation5 [shape = 'u8[65536]{0}', space=vmem, size = 0x10000, scoped, tag = 'output window, operand 0']
    %10 = vsyncpa [#allocation3], 0
    %s11 = scalar_lea.sflag [#allocation3], 1
    %12 = vsyncpa %s11, 0
    %13 = vsyncpa [#allocation4], 0
    %s14 = scalar_lea.sflag [#allocation4], 1
    %15 = vsyncpa %s14, 0
    loop: start=0, step=1, limit=4
    $region2: #{tpu_custom_call.1} parent=1 // loop_pre_header
      _
    $region3: #{tpu_custom_call.1} parent=1 // loop_header
      %s17 = sphi 0, %s21
      %p18 = scmp.ge.s32.totalorder %s17, 4
      %s27 = sphi 0, %s29
      %s30 = sphi 0, %s27
      %s31 = sphi 0, %s30
      %s47 = sphi 0, %s31
      %s51 = sphi 0, %s51
      %s53 = sphi 0, %s51
      %s54 = sphi 0, %s53
      %s68 = sphi 0, %s54
      %s72 = sphi 0, %s72
      %s74 = sphi 0, %s72
      %s75 = sphi 0, %s74
      %s89 = sphi 0, %s75
      %s93 = sphi 0, %s93
      %s95 = sphi 0, %s93
      %s96 = sphi 0, %s95
      %s110 = sphi 0, %s96
      %s114 = sphi 0, %s114
      %s116 = sphi 0, %s114
      %s117 = sphi 0, %s116
      %s131 = sphi 0, %s117
      %s137 = sphi 0, %s139
      %s140 = sphi 0, %s137
      %s141 = sphi 0, %s140
      %s157 = sphi 0, %s141
    $region4: #{tpu_custom_call.1} parent=1 // loop_header_branch
      %20 = sbr.rel (%p18) target = $region8
    $region5: #{tpu_custom_call.1} parent=1 // loop_body
      %s22 = ssub.s32 %s17, 1
      %s23 = ssub.s32 %s17, 2
      %s24 = sadd.s32 %s17, 1
      %s25 = ssub.s32 %s17, %s24
      %p26 = scmp.eq.s32.totalorder %s25, 0
      %s28 = sadd.s32 %s27, 1
      %s29 = scalar_select %p26, %s27, %s28
      %p32 = pneg %p26
      %p33 = scmp.eq.s32.totalorder %s17, 1
      %p34 = por %p32, %p33
      %p35 = scmp.ne.s32.totalorder %s27, %s30
      %p36 = scmp.eq.s32.totalorder %s17, 0
      %p37 = por %p35, %p36
      %p38 = scmp.ne.s32.totalorder %s27, %s30
      %p39 = scmp.eq.s32.totalorder %s22, 1
      %p40 = por %p38, %p39
      %p41 = scmp.ne.s32.totalorder %s30, %s31
      %p42 = scmp.eq.s32.totalorder %s22, 0
      %p43 = por %p41, %p42
      %p44 = scmp.ne.s32.totalorder %s30, %s31
      %p45 = scmp.eq.s32.totalorder %s23, 1
      %p46 = por %p44, %p45
      %p48 = scmp.ne.s32.totalorder %s31, %s47
      %p49 = scmp.eq.s32.totalorder %s23, 0
      %p50 = por %p48, %p49
      %s52 = sadd.s32 %s51, 1
      %p55 = scmp.eq.s32.totalorder %s17, 1
      %p56 = scmp.ne.s32.totalorder %s51, %s53
      %p57 = scmp.eq.s32.totalorder %s17, 0
      %p58 = por %p56, %p57
      %p59 = scmp.ne.s32.totalorder %s51, %s53
      %p60 = scmp.eq.s32.totalorder %s22, 1
      %p61 = por %p59, %p60
      %p62 = scmp.ne.s32.totalorder %s53, %s54
      %p63 = scmp.eq.s32.totalorder %s22, 0
      %p64 = por %p62, %p63
      %p65 = scmp.ne.s32.totalorder %s53, %s54
      %p66 = scmp.eq.s32.totalorder %s23, 1
      %p67 = por %p65, %p66
      %p69 = scmp.ne.s32.totalorder %s54, %s68
      %p70 = scmp.eq.s32.totalorder %s23, 0
      %p71 = por %p69, %p70
      %s73 = sadd.s32 %s72, 1
      %p76 = scmp.eq.s32.totalorder %s17, 1
      %p77 = scmp.ne.s32.totalorder %s72, %s74
      %p78 = scmp.eq.s32.totalorder %s17, 0
      %p79 = por %p77, %p78
      %p80 = scmp.ne.s32.totalorder %s72, %s74
      %p81 = scmp.eq.s32.totalorder %s22, 1
      %p82 = por %p80, %p81
      %p83 = scmp.ne.s32.totalorder %s74, %s75
      %p84 = scmp.eq.s32.totalorder %s22, 0
      %p85 = por %p83, %p84
      %p86 = scmp.ne.s32.totalorder %s74, %s75
      %p87 = scmp.eq.s32.totalorder %s23, 1
      %p88 = por %p86, %p87
      %p90 = scmp.ne.s32.totalorder %s75, %s89
      %p91 = scmp.eq.s32.totalorder %s23, 0
      %p92 = por %p90, %p91
      %s94 = sadd.s32 %s93, 1
      %p97 = scmp.eq.s32.totalorder %s17, 1
      %p98 = scmp.ne.s32.totalorder %s93, %s95
      %p99 = scmp.eq.s32.totalorder %s17, 0
      %p100 = por %p98, %p99
      %p101 = scmp.ne.s32.totalorder %s93, %s95
      %p102 = scmp.eq.s32.totalorder %s22, 1
      %p103 = por %p101, %p102
      %p104 = scmp.ne.s32.totalorder %s95, %s96
      %p105 = scmp.eq.s32.totalorder %s22, 0
      %p106 = por %p104, %p105
      %p107 = scmp.ne.s32.totalorder %s95, %s96
      %p108 = scmp.eq.s32.totalorder %s23, 1
      %p109 = por %p107, %p108
      %p111 = scmp.ne.s32.totalorder %s96, %s110
      %p112 = scmp.eq.s32.totalorder %s23, 0
      %p113 = por %p111, %p112
      %s115 = sadd.s32 %s114, 1
      %p118 = scmp.eq.s32.totalorder %s17, 1
      %p119 = scmp.ne.s32.totalorder %s114, %s116
      %p120 = scmp.eq.s32.totalorder %s17, 0
      %p121 = por %p119, %p120
      %p122 = scmp.ne.s32.totalorder %s114, %s116
      %p123 = scmp.eq.s32.totalorder %s22, 1
      %p124 = por %p122, %p123
      %p125 = scmp.ne.s32.totalorder %s116, %s117
      %p126 = scmp.eq.s32.totalorder %s22, 0
      %p127 = por %p125, %p126
      %p128 = scmp.ne.s32.totalorder %s116, %s117
      %p129 = scmp.eq.s32.totalorder %s23, 1
      %p130 = por %p128, %p129
      %p132 = scmp.ne.s32.totalorder %s117, %s131
      %p133 = scmp.eq.s32.totalorder %s23, 0
      %p134 = por %p132, %p133
      %s135 = ssub.s32 %s17, %s24
      %p136 = scmp.eq.s32.totalorder %s135, 0
      %s138 = sadd.s32 %s137, 1
      %s139 = scalar_select %p136, %s137, %s138
      %p142 = pneg %p136
      %p143 = scmp.eq.s32.totalorder %s17, 1
      %p144 = por %p142, %p143
      %p145 = scmp.ne.s32.totalorder %s137, %s140
      %p146 = scmp.eq.s32.totalorder %s17, 0
      %p147 = por %p145, %p146
      %p148 = scmp.ne.s32.totalorder %s137, %s140
      %p149 = scmp.eq.s32.totalorder %s22, 1
      %p150 = por %p148, %p149
      %p151 = scmp.ne.s32.totalorder %s140, %s141
      %p152 = scmp.eq.s32.totalorder %s22, 0
      %p153 = por %p151, %p152
      %p154 = scmp.ne.s32.totalorder %s140, %s141
      %p155 = scmp.eq.s32.totalorder %s23, 1
      %p156 = por %p154, %p155
      %p158 = scmp.ne.s32.totalorder %s141, %s157
      %p159 = scmp.eq.s32.totalorder %s23, 0
      %p160 = por %p158, %p159
      %p161 = scmp.le.s32.totalorder 1, %s17
      %p162 = scmp.lt.s32.totalorder %s17, 3
      %p163 = pnand %p161, %p162
      %p164 = pneg %p163
      // Predicated region
      $region9: #{tpu_custom_call.1} parent=5 // pred_check
        _
      $region10: #{tpu_custom_call.1} parent=5 // pred_check_branch
        %166 = sbr.rel (%p163) target = $region12
      $region11: #{tpu_custom_call.1} parent=5 // pred_region
        %s167 = ssub.s32 %s17, 1
        // Predicated region
        $region13: #{tpu_custom_call.1} parent=11 // pred_check
          %p168 = pneg %p64
        $region14: #{tpu_custom_call.1} parent=11 // pred_check_branch
          %170 = sbr.rel (%p168) target = $region16
        $region15: #{tpu_custom_call.1} parent=11 // pred_region
          _
        $region16: #{tpu_custom_call.1} parent=11 // pred_fallthru
          _
        // Predicated region
        $region17: #{tpu_custom_call.1} parent=11 // pred_check
          %p171 = pneg %p85
        $region18: #{tpu_custom_call.1} parent=11 // pred_check_branch
          %173 = sbr.rel (%p171) target = $region20
        $region19: #{tpu_custom_call.1} parent=11 // pred_region
          _
        $region20: #{tpu_custom_call.1} parent=11 // pred_fallthru
          _
        // Predicated region
        $region21: #{tpu_custom_call.1} parent=11 // pred_check
          %p174 = pneg %p106
        $region22: #{tpu_custom_call.1} parent=11 // pred_check_branch
          %176 = sbr.rel (%p174) target = $region24
        $region23: #{tpu_custom_call.1} parent=11 // pred_region
          _
        $region24: #{tpu_custom_call.1} parent=11 // pred_fallthru
          _
        // Predicated region
        $region25: #{tpu_custom_call.1} parent=11 // pred_check
          %p177 = pneg %p127
        $region26: #{tpu_custom_call.1} parent=11 // pred_check_branch
          %179 = sbr.rel (%p177) target = $region28
        $region27: #{tpu_custom_call.1} parent=11 // pred_region
          _
        $region28: #{tpu_custom_call.1} parent=11 // pred_fallthru
          _
      $region12: #{tpu_custom_call.1} parent=5 // pred_fallthru
        _
      %p180 = scmp.lt.s32.totalorder %s17, 2
      // Predicated region
      $region29: #{tpu_custom_call.1} parent=5 // pred_check
        %p181 = pneg %p180
      $region30: #{tpu_custom_call.1} parent=5 // pred_check_branch
        %183 = sbr.rel (%p181) target = $region32
      $region31: #{tpu_custom_call.1} parent=5 // pred_region
        // Predicated region
        $region33: #{tpu_custom_call.1} parent=31 // pred_check
          %p184 = pneg %p37
        $region34: #{tpu_custom_call.1} parent=31 // pred_check_branch
          %186 = sbr.rel (%p184) target = $region36
        $region35: #{tpu_custom_call.1} parent=31 // pred_region
          %s187 = sand.u32 %s27, 1
          %s188 = scalar_lea.sflag [#allocation3], %s187
          %s189 = sand.u32 %s27, 1
          %s190 = smul.addr %s189, 64
          %s191 = scalar_lea.vmem [#allocation2], %s190
          %s193 = ssub.s32 1024, 1024
          %194 = vsyncadd %s188, %s193
          %s195 = smul.addr %s17, 8
          %s196 = smul.addr %s195, 128
          %s197 = scalar_lea.hbm %s0, %s196
          %s198 = sshll.u32 %s191, 4
          %s199 = int_to_ptr.vmem [resolvable:$true] %s198
          %204 = dma.hbm_to_vmem [thread:$0]  %s197, 1024, %s199, %s188, 256, 256, 16
        $region36: #{tpu_custom_call.1} parent=31 // pred_fallthru
          _
      $region32: #{tpu_custom_call.1} parent=5 // pred_fallthru
        _
      %p205 = scmp.le.s32.totalorder 1, %s17
      %p206 = scmp.lt.s32.totalorder %s17, 3
      %p207 = pnand %p205, %p206
      %p208 = pneg %p207
      // Predicated region
      $region37: #{tpu_custom_call.1} parent=5 // pred_check
        _
      $region38: #{tpu_custom_call.1} parent=5 // pred_check_branch
        %210 = sbr.rel (%p207) target = $region40
      $region39: #{tpu_custom_call.1} parent=5 // pred_region
        %s211 = ssub.s32 %s17, 1
        %s212 = sand.u32 %s30, 1
        %s213 = scalar_lea.sflag [#allocation3], %s212
        %s214 = sand.u32 %s30, 1
        %s215 = smul.addr %s214, 64
        %s216 = scalar_lea.vmem [#allocation2], %s215
        // Predicated region
        $region41: #{tpu_custom_call.1} parent=39 // pred_check
          %p217 = pneg %p43
        $region42: #{tpu_custom_call.1} parent=39 // pred_check_branch
          %219 = sbr.rel (%p217) target = $region44
        $region43: #{tpu_custom_call.1} parent=39 // pred_region
          %220 = dma.done %s213, 1024
        $region44: #{tpu_custom_call.1} parent=39 // pred_fallthru
          _
        %s221 = sand.u32 %s30, 1
        %s222 = scalar_lea.sflag [#allocation3], %s221
        %s223 = sand.u32 %s30, 1
        %s224 = smul.addr %s223, 64
        %s225 = scalar_lea.vmem [#allocation2], %s224
        %p226 = pneg %p43
        %p227 = pneg %p40
        %p228 = pneg %p64
        %p229 = pneg %p61
        %p230 = pneg %p85
        %p231 = pneg %p82
        %p232 = pneg %p106
        %p233 = pneg %p103
        %p234 = pneg %p127
        %p235 = pneg %p124
        %p236 = pneg %p153
        %p237 = pneg %p150
        %s238 = sand.u32 %s140, 1
        %s239 = scalar_lea.sflag [#allocation4], %s238
        %s240 = sand.u32 %s140, 1
        %s241 = smul.addr %s240, 64
        %s242 = scalar_lea.vmem [#allocation5], %s241
        %v243 = vld [vmem:[%s216] sm:$0xff]
        %v244 = vld [vmem:[%s216 + $0x8] sm:$0xff]
        %v245 = vld [vmem:[%s216 + $0x10] sm:$0xff]
        %v246 = vld [vmem:[%s216 + $0x18] sm:$0xff]
        %v247 = vld [vmem:[%s216 + $0x20] sm:$0xff]
        %v248 = vld [vmem:[%s216 + $0x28] sm:$0xff]
        %v249 = vld [vmem:[%s216 + $0x30] sm:$0xff]
        %v250 = vld [vmem:[%s216 + $0x38] sm:$0xff]
        %v251 = vadd.f32 %v243, %v244
        %252 = vadd.xlane.f32.xlu0 %v251
        %v253 = vpop.xlane.xlu0 %252
        %v254 = vadd.f32 %v245, %v246
        %255 = vadd.xlane.f32.xlu0 %v254
        %v256 = vpop.xlane.xlu0 %255
        %v257 = vadd.f32 %v247, %v248
        %258 = vadd.xlane.f32.xlu0 %v257
        %v259 = vpop.xlane.xlu0 %258
        %v260 = vadd.f32 %v249, %v250
        %261 = vadd.xlane.f32.xlu0 %v260
        %v262 = vpop.xlane.xlu0 %261
        %v263 = vmul.f32 %v253, 0.00390625
        %v264 = vmul.f32 %v256, 0.00390625
        %v265 = vmul.f32 %v259, 0.00390625
        %v266 = vmul.f32 %v262, 0.00390625
        %v267 = vld [vmem:[%s1] sm:$0xff]
        %v268 = vld [vmem:[%s1 + $0x8] sm:$0xff]
        %v269 = vld [vmem:[%s1 + $0x10] sm:$0xff]
        %v270 = vld [vmem:[%s1 + $0x18] sm:$0xff]
        %v271 = vmul.f32 %v267, %v263
        %v272 = vmul.f32 %v268, %v264
        %v273 = vmul.f32 %v269, %v265
        %v274 = vmul.f32 %v270, %v266
        %vm275 = vcmask 64512
        %v276 = vsel %vm275, %v271, 0.0
        %v277 = vsel %vm275, %v272, 0.0
        %v278 = vadd.f32 %v276, %v277
        %v279 = vsel %vm275, %v273, 0.0
        %v280 = vadd.f32 %v278, %v279
        %v281 = vsel %vm275, %v274, 0.0
        %v282 = vadd.f32 %v280, %v281
        %v283 = vrot.slane %v282, 4
        %v284 = vadd.f32 %v282, %v283
        %v285 = vrot.slane %v284, 2
        %v286 = vadd.f32 %v284, %v285
        %v287 = vrot.slane %v286, 1
        %v288 = vadd.f32 %v286, %v287
        %v289 = vld [vmem:[%s2] sm:$0x1]
        %v290 = vadd.f32 %v288, %v289
        %v291 = vmax.f32 %v290, 0.0
        %v292 = vld [vmem:[%s3] sm:$0xff]
        %v293 = vld [vmem:[%s3 + $0x8] sm:$0xff]
        %v294 = vld [vmem:[%s3 + $0x10] sm:$0xff]
        %v295 = vld [vmem:[%s3 + $0x18] sm:$0xff]
        %v296 = vlaneseq
        %v297 = vshrl.u32 %v296, 7
        %v298 = vsub.s32 0, %v297
        %v299 = vrot.slane %v291, %v298
        %v300 = vmul.f32 %v292, %v299
        %v301 = vmul.f32 %v293, %v299
        %v302 = vmul.f32 %v294, %v299
        %v303 = vmul.f32 %v295, %v299
        %v304 = vsel %vm275, %v300, 0.0
        %305 = vadd.xlane.f32.xlu0 %v304
        %v306 = vpop.xlane.xlu0 %305
        %v307 = vsel %vm275, %v301, 0.0
        %308 = vadd.xlane.f32.xlu0 %v307
        %v309 = vpop.xlane.xlu0 %308
        %v310 = vsel %vm275, %v302, 0.0
        %311 = vadd.xlane.f32.xlu0 %v310
        %v312 = vpop.xlane.xlu0 %311
        %v313 = vsel %vm275, %v303, 0.0
        %314 = vadd.xlane.f32.xlu0 %v313
        %v315 = vpop.xlane.xlu0 %314
        %v316 = vld [vmem:[%s4] sm:$0xff]
        %v317 = vld [vmem:[%s4 + $0x8] sm:$0xff]
        %v318 = vld [vmem:[%s4 + $0x10] sm:$0xff]
        %v319 = vld [vmem:[%s4 + $0x18] sm:$0xff]
        %v320 = vadd.f32 %v306, %v316
        %v321 = vadd.f32 %v309, %v317
        %v322 = vadd.f32 %v312, %v318
        %v323 = vadd.f32 %v315, %v319
        %v324 = vxor.u32 %v320, 2147483648
        %v325 = vxor.u32 %v321, 2147483648
        %v326 = vxor.u32 %v322, 2147483648
        %v327 = vxor.u32 %v323, 2147483648
        %v328 = vmul.f32 %v324, 1.442695
        %v329 = vpow.pop %v328
        %v330 = vmul.f32 %v325, 1.442695
        %v331 = vpow.pop %v330
        %v332 = vmul.f32 %v326, 1.442695
        %v333 = vpow.pop %v332
        %v334 = vmul.f32 %v327, 1.442695
        %v335 = vpow.pop %v334
        %v336 = vadd.f32 %v329, 1.0
        %v337 = vadd.f32 %v331, 1.0
        %v338 = vadd.f32 %v333, 1.0
        %v339 = vadd.f32 %v335, 1.0
        %v340 = vrcp.pop %v336
        %v341 = vmul.f32 1.0, %v340
        %v342 = vrcp.pop %v337
        %v343 = vmul.f32 1.0, %v342
        %v344 = vrcp.pop %v338
        %v345 = vmul.f32 1.0, %v344
        %v346 = vrcp.pop %v339
        %v347 = vmul.f32 1.0, %v346
        %349 = vset.pattern.permute.xlu0 0
        %350 = vperm.xlu0 %349, %v341
        %v351 = vpop.permute.xlu0 %350
        %354 = vset.pattern.permute.xlu0 0
        %355 = vperm.xlu0 %354, %v343
        %v356 = vpop.permute.xlu0 %355
        %359 = vset.pattern.permute.xlu0 0
        %360 = vperm.xlu0 %359, %v345
        %v361 = vpop.permute.xlu0 %360
        %364 = vset.pattern.permute.xlu0 0
        %365 = vperm.xlu0 %364, %v347
        %v366 = vpop.permute.xlu0 %365
        %v368 = vmul.f32 %v243, %v351
        %v369 = vmul.f32 %v244, %v351
        %v370 = vmul.f32 %v245, %v356
        %v371 = vmul.f32 %v246, %v356
        %v372 = vmul.f32 %v247, %v361
        %v373 = vmul.f32 %v248, %v361
        %v374 = vmul.f32 %v249, %v366
        %v375 = vmul.f32 %v250, %v366
        %376 = vst [vmem:[%s242] sm:$0xff] %v368
        %377 = vst [vmem:[%s242 + $0x8] sm:$0xff] %v369
        %378 = vst [vmem:[%s242 + $0x10] sm:$0xff] %v370
        %379 = vst [vmem:[%s242 + $0x18] sm:$0xff] %v371
        %380 = vst [vmem:[%s242 + $0x20] sm:$0xff] %v372
        %381 = vst [vmem:[%s242 + $0x28] sm:$0xff] %v373
        %382 = vst [vmem:[%s242 + $0x30] sm:$0xff] %v374
        %383 = vst [vmem:[%s242 + $0x38] sm:$0xff] %v375
        %s384 = sand.u32 %s140, 1
        %s385 = scalar_lea.sflag [#allocation4], %s384
        %s386 = sand.u32 %s140, 1
        %s387 = smul.addr %s386, 64
        %s388 = scalar_lea.vmem [#allocation5], %s387
        // Predicated region
        $region45: #{tpu_custom_call.1} parent=39 // pred_check
          %p389 = pneg %p150
        $region46: #{tpu_custom_call.1} parent=39 // pred_check_branch
          %391 = sbr.rel (%p389) target = $region48
        $region47: #{tpu_custom_call.1} parent=39 // pred_region
          %s393 = ssub.s32 1024, 1024
          %394 = vsyncadd %s385, %s393
          %s395 = smul.addr %s22, 8
          %s396 = smul.addr %s395, 128
          %s397 = scalar_lea.hbm %s5, %s396
          %s398 = sshll.u32 %s388, 4
          %s399 = int_to_ptr.vmem [resolvable:$true] %s398
          %404 = dma.vmem_to_hbm [thread:$0]  %s399, 1024, %s397, %s385, 256, 256, 16
        $region48: #{tpu_custom_call.1} parent=39 // pred_fallthru
          _
      $region40: #{tpu_custom_call.1} parent=5 // pred_fallthru
        _
      %p405 = scmp.le.s32.totalorder 2, %s17
      // Predicated region
      $region49: #{tpu_custom_call.1} parent=5 // pred_check
        %p406 = pneg %p405
      $region50: #{tpu_custom_call.1} parent=5 // pred_check_branch
        %408 = sbr.rel (%p406) target = $region52
      $region51: #{tpu_custom_call.1} parent=5 // pred_region
        %s409 = ssub.s32 %s17, 2
        // Predicated region
        $region53: #{tpu_custom_call.1} parent=51 // pred_check
          %p410 = pneg %p156
        $region54: #{tpu_custom_call.1} parent=51 // pred_check_branch
          %412 = sbr.rel (%p410) target = $region56
        $region55: #{tpu_custom_call.1} parent=51 // pred_region
          %s413 = sand.u32 %s141, 1
          %s414 = scalar_lea.sflag [#allocation4], %s413
          %s415 = sand.u32 %s141, 1
          %s416 = smul.addr %s415, 64
          %s417 = scalar_lea.vmem [#allocation5], %s416
          %418 = dma.done %s414, 1024
        $region56: #{tpu_custom_call.1} parent=51 // pred_fallthru
          _
      $region52: #{tpu_custom_call.1} parent=5 // pred_fallthru
        _
    $region6: #{tpu_custom_call.1} parent=1 // loop_footer
      %s21 = sadd.s32 1, %s17
    $region7: #{tpu_custom_call.1} parent=1 // loop_footer_branch
      %16 = sbr.rel target = $region3
    $region8: #{tpu_custom_call.1} parent=1 // loop_exit
      _
    %419 = vsyncpa [#allocation3], 1
    %s420 = scalar_lea.sflag [#allocation3], 1
    %421 = vsyncpa %s420, 1
    %422 = vsyncpa [#allocation4], 1
    %s423 = scalar_lea.sflag [#allocation4], 1
    %424 = vsyncpa %s423, 1

</llo_original>
